<compile_context>
chip_gen: v5e
topology: v5e:2x2
jax: 0.10.0
libtpu: 0.0.40
codegen_flags: <defaults>
</compile_context>

<pallas_src>
import math

import jax
import jax.numpy as jnp
from jax.experimental import pallas as pl
from jax.experimental.pallas import tpu as pltpu

EMB_DIM = 32
HIDDEN_DIM = 64
NUM_COMPONENTS = 3
HEAD_GROUP = 8                       # each head group padded to 8 sublanes
HEAD_ROWS = 3 * HEAD_GROUP           # fused head weight rows (means|log_stds|logits)
LOG_2PI = math.log(2.0 * math.pi)


def _round_up(n, m):
    return ((n + m - 1) // m) * m


def _cmm_kernel(x_ref, y_ref, w1_ref, b1_ref, w2_ref, b2_ref,
                w3_ref, b3_ref, o_ref):
    cdt = w1_ref.dtype               # compute dtype (bf16 by default)
    K = NUM_COMPONENTS

    x = x_ref[...]                   # (Din, T)  compute dtype, batch on lanes
    y = y_ref[...]                   # (1,   T)  f32

    # --- ContextEncoder: Linear -> ReLU -> Linear -> ReLU -----------------
    h1 = jnp.dot(w1_ref[...], x, preferred_element_type=jnp.float32)
    h1 = jnp.maximum(h1.astype(cdt) + b1_ref[...], 0.0)          # (64, T) cdt
    h2 = jnp.dot(w2_ref[...], h1, preferred_element_type=jnp.float32)
    h2 = jnp.maximum(h2.astype(cdt) + b2_ref[...], 0.0)          # (32, T) cdt

    # --- fused MixtureHead: ONE matmul, sublane-aligned groups ------------
    head = jnp.dot(w3_ref[...], h2, preferred_element_type=jnp.float32)
    head = head + b3_ref[...]                                    # (24, T) f32
    means = head[0:K]                                            # (K, T)
    log_stds = head[HEAD_GROUP:HEAD_GROUP + K]
    logits = head[2 * HEAD_GROUP:2 * HEAD_GROUP + K]

    # --- mixture log-likelihood (f32, matches the PyTorch expression) -----
    inv_stds = jnp.exp(-log_stds)                 # EUP, no divide
    z = (y - means) * inv_stds
    clp = -0.5 * (z * z + 2.0 * log_stds + LOG_2PI)              # (K, T)

    # Fused softmax + mixture sum; `shift` reused for both exponentials.
    m = jnp.max(logits, axis=0, keepdims=True)                   # (1, T)
    shift = logits - m                                           # (K, T)
    s = jnp.sum(jnp.exp(shift), axis=0, keepdims=True)           # (1, T)
    a = jnp.sum(jnp.exp(shift + clp), axis=0, keepdims=True)     # (1, T)

    # log(a/s + 1e-9) == log(a + 1e-9*s) - log(s)   (exact, no VPU divide)
    o_ref[...] = jnp.log(a + 1e-9 * s) - jnp.log(s)              # (1, T)


def conditional_mixture_log_prob(x, y, params, tile_b=16384,
                                 compute_dtype=jnp.bfloat16):
    """x: (B, context_dim) f32, y: (B,) f32 -> (B,) f32 total log prob."""
    B, din = x.shape
    K = NUM_COMPONENTS
    w1, b1, w2, b2, w3, b3 = params      # stored (in, out) — see init_params
    cbytes = jnp.dtype(compute_dtype).itemsize

    # --- tile sizing --------------------------------------------------------
    bp128 = _round_up(max(B, 1), 128)
    tile_b = max(128, min(int(tile_b), bp128))
    # Keep >= 2 grid steps when the batch spans > one lane tile so the
    # "parallel" axis can shard across both v7x TensorCores.
    if bp128 >= 256 and tile_b >= bp128:
        tile_b = _round_up(-(-bp128 // 2), 128)
    bp = _round_up(B, tile_b)
    grid = (bp // tile_b,)

    # --- inputs: batch on the lane axis ------------------------------------
    xp = jnp.pad(x.astype(jnp.float32), ((0, bp - B), (0, 0)))
    yp = jnp.pad(y.astype(jnp.float32), (0, bp - B))
    x_t = xp.T.astype(compute_dtype)                 # (Din, Bp)
    y_t = yp.reshape(1, bp)                          # (1,   Bp) f32

    # --- parameters: (out, in) layout; fused, sublane-aligned head ---------
    w1_t = w1.T.astype(compute_dtype)                # (64, Din)
    b1_c = b1.reshape(-1, 1).astype(compute_dtype)   # (64, 1)
    w2_t = w2.T.astype(compute_dtype)                # (32, 64)
    b2_c = b2.reshape(-1, 1).astype(compute_dtype)   # (32, 1)

    w3_t = w3.T.astype(jnp.float32)                  # (3K, 32)
    b3_v = b3.reshape(-1).astype(jnp.float32)        # (3K,)
    w3_f = jnp.zeros((HEAD_ROWS, EMB_DIM), jnp.float32)
    b3_f = jnp.zeros((HEAD_ROWS, 1), jnp.float32)
    for g in range(3):                               # means / log_stds / logits
        w3_f = w3_f.at[g * HEAD_GROUP:g * HEAD_GROUP + K].set(w3_t[g * K:(g + 1) * K])
        b3_f = b3_f.at[g * HEAD_GROUP:g * HEAD_GROUP + K, 0].set(b3_v[g * K:(g + 1) * K])
    w3_f = w3_f.astype(compute_dtype)                # head bias stays f32

    # --- VMEM budget (rough per-tile footprint + headroom) -----------------
    io = 2 * tile_b * (din * cbytes + 8 * 4 + 8 * 4)          # x / y / out, dbl-buffered
    live = tile_b * ((HIDDEN_DIM + EMB_DIM) * cbytes          # h1 / h2
                     + HEAD_ROWS * 4                          # head output
                     + 10 * 8 * 4)                            # (K,T) temps (sublane-padded)
    vmem_limit = int(min(48 << 20, max(32 << 20, 2 * (io + live) + (1 << 20))))

    flops = 2 * bp * (din * HIDDEN_DIM + HIDDEN_DIM * EMB_DIM + EMB_DIM * HEAD_ROWS)
    cost = pl.CostEstimate(flops=flops,
                           transcendentals=(3 * K + 2) * bp,
                           bytes_accessed=bp * (din * cbytes + 8))

    def stream(rows):
        return pl.BlockSpec((rows, tile_b), lambda i: (0, i))

    def resident(shape):
        return pl.BlockSpec(shape, lambda i: (0, 0))

    in_specs = [
        stream(din),                                 # x tile (streamed)
        stream(1),                                   # y tile (streamed)
        resident((HIDDEN_DIM, din)), resident((HIDDEN_DIM, 1)),
        resident((EMB_DIM, HIDDEN_DIM)), resident((EMB_DIM, 1)),
        resident((HEAD_ROWS, EMB_DIM)), resident((HEAD_ROWS, 1)),
    ]
    # TODO(synk): if the v7x bundle dump shows exposed DMA at tile boundaries,
    # add pipeline_mode=pl.Buffered(3) to the x BlockSpec.

    out = pl.pallas_call(
        _cmm_kernel,
        out_shape=jax.ShapeDtypeStruct((1, bp), jnp.float32),
        grid=grid,
        in_specs=in_specs,
        out_specs=stream(1),
        compiler_params=pltpu.CompilerParams(
            dimension_semantics=("parallel",),
            vmem_limit_bytes=vmem_limit),
        cost_estimate=cost,
    )(x_t, y_t, w1_t, b1_c, w2_t, b2_c, w3_f, b3_f)

    return out[0, :B]


def init_params(context_dim, emb_dim=EMB_DIM, num_components=NUM_COMPONENTS,
                seed=0):
    """Deterministic synthetic parameters (stored as (in, out) matrices)."""
    key = jax.random.PRNGKey(seed)
    ks = jax.random.split(key, 6)

    def lin(kw, kb, fan_in, fan_out):
        bound = 1.0 / math.sqrt(fan_in)
        w = jax.random.uniform(kw, (fan_in, fan_out), jnp.float32, -bound, bound)
        b = jax.random.uniform(kb, (fan_out,), jnp.float32, -bound, bound)
        return w, b

    w1, b1 = lin(ks[0], ks[1], context_dim, HIDDEN_DIM)
    w2, b2 = lin(ks[2], ks[3], HIDDEN_DIM, emb_dim)
    w3, b3 = lin(ks[4], ks[5], emb_dim, num_components * 3)
    return (w1, b1, w2, b2, w3, b3)


def _reference(x, y, params):
    """Pure-JAX reference of the PyTorch forward, for a sanity check."""
    w1, b1, w2, b2, w3, b3 = params
    h = jnp.maximum(x @ w1 + b1, 0.0)
    h = jnp.maximum(h @ w2 + b2, 0.0)
    out = h @ w3 + b3
    K = NUM_COMPONENTS
    means, log_stds, logits = out[:, :K], out[:, K:2 * K], out[:, 2 * K:]
    stds = jnp.exp(log_stds)
    weights = jax.nn.softmax(logits, axis=-1)
    yk = y[:, None]
    clp = -0.5 * (((yk - means) / stds) ** 2 + 2.0 * log_stds + LOG_2PI)
    return jnp.log(jnp.sum(weights * jnp.exp(clp), axis=-1) + 1e-9)


if __name__ == "__main__":
    context_dim = 16
    B = 8

    params = init_params(context_dim)

    key = jax.random.PRNGKey(0)
    kx, ky = jax.random.split(key)
    x = jax.random.normal(kx, (B, context_dim), dtype=jnp.float32)
    y = jax.random.normal(ky, (B,), dtype=jnp.float32)

    ref = _reference(x, y, params)

    # f32 compute path: tight numerical check.
    lp_f32 = conditional_mixture_log_prob(x, y, params,
                                          compute_dtype=jnp.float32)
    jax.block_until_ready(lp_f32)
    assert lp_f32.shape == (B,)
    assert jnp.allclose(lp_f32, ref, atol=1e-4, rtol=1e-4), (lp_f32, ref)

    # bf16 compute path (default): looser tolerance vs. the f32 reference.
    lp_bf16 = conditional_mixture_log_prob(x, y, params)
    jax.block_until_ready(lp_bf16)
    assert lp_bf16.shape == (B,)
    assert jnp.allclose(lp_bf16, ref, atol=5e-2, rtol=5e-2), (lp_bf16, ref)

    print("KERNEL_OK")
</pallas_src>

<mosaic_0001>
module attributes {stable_mosaic.version = 11 : i64} {
  func.func @_cmm_kernel(%arg0: i32, %arg1: memref<16x128xf32, #tpu.memory_space<vmem>>, %arg2: memref<1x128xf32, #tpu.memory_space<vmem>>, %arg3: memref<64x16xf32, #tpu.memory_space<vmem>>, %arg4: memref<64x1xf32, #tpu.memory_space<vmem>>, %arg5: memref<32x64xf32, #tpu.memory_space<vmem>>, %arg6: memref<32x1xf32, #tpu.memory_space<vmem>>, %arg7: memref<24x32xf32, #tpu.memory_space<vmem>>, %arg8: memref<24x1xf32, #tpu.memory_space<vmem>>, %arg9: memref<1x128xf32, #tpu.memory_space<vmem>>) attributes {dimension_semantics = [#tpu.dimension_semantics<parallel>], iteration_bounds = array<i64: 1>, scalar_prefetch = 0 : i64, scratch_operands = 0 : i64, tpu.core_type = #tpu.core_type<tc>, window_params = [{transform_indices = @transform_0, window_bounds = array<i64: 16, 128>}, {transform_indices = @transform_1, window_bounds = array<i64: 1, 128>}, {pipeline_mode = #tpu.pipeline_mode<synchronous>, transform_indices = @transform_2, window_bounds = array<i64: 64, 16>}, {pipeline_mode = #tpu.pipeline_mode<synchronous>, transform_indices = @transform_3, window_bounds = array<i64: 64, 1>}, {pipeline_mode = #tpu.pipeline_mode<synchronous>, transform_indices = @transform_4, window_bounds = array<i64: 32, 64>}, {pipeline_mode = #tpu.pipeline_mode<synchronous>, transform_indices = @transform_5, window_bounds = array<i64: 32, 1>}, {pipeline_mode = #tpu.pipeline_mode<synchronous>, transform_indices = @transform_6, window_bounds = array<i64: 24, 32>}, {pipeline_mode = #tpu.pipeline_mode<synchronous>, transform_indices = @transform_7, window_bounds = array<i64: 24, 1>}, {transform_indices = @transform_8, window_bounds = array<i64: 1, 128>}]} {
    %c0 = arith.constant 0 : index
    %c0_0 = arith.constant 0 : index
    %0 = vector.load %arg1[%c0, %c0_0] : memref<16x128xf32, #tpu.memory_space<vmem>>, vector<16x128xf32>
    %c0_1 = arith.constant 0 : index
    %c0_2 = arith.constant 0 : index
    %1 = vector.load %arg2[%c0_1, %c0_2] : memref<1x128xf32, #tpu.memory_space<vmem>>, vector<1x128xf32>
    %c0_3 = arith.constant 0 : index
    %c0_4 = arith.constant 0 : index
    %2 = vector.load %arg3[%c0_3, %c0_4] : memref<64x16xf32, #tpu.memory_space<vmem>>, vector<64x16xf32>
    %cst = arith.constant dense<0.000000e+00> : vector<64x128xf32>
    %3 = tpu.matmul %2, %0, %cst {dimension_numbers = #tpu.dot_dimension_numbers<[1], [0], [0], [1], [0, 0, 1, 1], [], []>} : vector<64x16xf32>, vector<16x128xf32>, vector<64x128xf32> -> vector<64x128xf32>
    %c0_5 = arith.constant 0 : index
    %c0_6 = arith.constant 0 : index
    %4 = vector.load %arg4[%c0_5, %c0_6] : memref<64x1xf32, #tpu.memory_space<vmem>>, vector<64x1xf32>
    %5 = vector.broadcast %4 : vector<64x1xf32> to vector<64x128xf32>
    %6 = arith.addf %3, %5 : vector<64x128xf32>
    %cst_7 = arith.constant 0.000000e+00 : f32
    %7 = vector.broadcast %cst_7 : f32 to vector<64x128xf32>
    %8 = arith.maximumf %6, %7 : vector<64x128xf32>
    %c0_8 = arith.constant 0 : index
    %c0_9 = arith.constant 0 : index
    %9 = vector.load %arg5[%c0_8, %c0_9] : memref<32x64xf32, #tpu.memory_space<vmem>>, vector<32x64xf32>
    %cst_10 = arith.constant dense<0.000000e+00> : vector<32x128xf32>
    %10 = tpu.matmul %9, %8, %cst_10 {dimension_numbers = #tpu.dot_dimension_numbers<[1], [0], [0], [1], [0, 0, 1, 1], [], []>} : vector<32x64xf32>, vector<64x128xf32>, vector<32x128xf32> -> vector<32x128xf32>
    %c0_11 = arith.constant 0 : index
    %c0_12 = arith.constant 0 : index
    %11 = vector.load %arg6[%c0_11, %c0_12] : memref<32x1xf32, #tpu.memory_space<vmem>>, vector<32x1xf32>
    %12 = vector.broadcast %11 : vector<32x1xf32> to vector<32x128xf32>
    %13 = arith.addf %10, %12 : vector<32x128xf32>
    %cst_13 = arith.constant 0.000000e+00 : f32
    %14 = vector.broadcast %cst_13 : f32 to vector<32x128xf32>
    %15 = arith.maximumf %13, %14 : vector<32x128xf32>
    %c0_14 = arith.constant 0 : index
    %c0_15 = arith.constant 0 : index
    %16 = vector.load %arg7[%c0_14, %c0_15] : memref<24x32xf32, #tpu.memory_space<vmem>>, vector<24x32xf32>
    %cst_16 = arith.constant dense<0.000000e+00> : vector<24x128xf32>
    %17 = tpu.matmul %16, %15, %cst_16 {dimension_numbers = #tpu.dot_dimension_numbers<[1], [0], [0], [1], [0, 0, 1, 1], [], []>} : vector<24x32xf32>, vector<32x128xf32>, vector<24x128xf32> -> vector<24x128xf32>
    %c0_17 = arith.constant 0 : index
    %c0_18 = arith.constant 0 : index
    %18 = vector.load %arg8[%c0_17, %c0_18] : memref<24x1xf32, #tpu.memory_space<vmem>>, vector<24x1xf32>
    %19 = vector.broadcast %18 : vector<24x1xf32> to vector<24x128xf32>
    %20 = arith.addf %17, %19 : vector<24x128xf32>
    %21 = vector.extract_strided_slice %20 {offsets = [0, 0], sizes = [3, 128], strides = [1, 1]} : vector<24x128xf32> to vector<3x128xf32>
    %22 = vector.extract_strided_slice %20 {offsets = [8, 0], sizes = [3, 128], strides = [1, 1]} : vector<24x128xf32> to vector<3x128xf32>
    %23 = vector.extract_strided_slice %20 {offsets = [16, 0], sizes = [3, 128], strides = [1, 1]} : vector<24x128xf32> to vector<3x128xf32>
    %cst_19 = arith.constant 0.000000e+00 : f32
    %24 = vector.broadcast %cst_19 : f32 to vector<3x128xf32>
    %25 = arith.subf %24, %22 : vector<3x128xf32>
    %26 = math.exp %25 : vector<3x128xf32>
    %27 = vector.broadcast %1 : vector<1x128xf32> to vector<3x128xf32>
    %28 = arith.subf %27, %21 : vector<3x128xf32>
    %29 = arith.mulf %28, %26 : vector<3x128xf32>
    %30 = arith.mulf %29, %29 : vector<3x128xf32>
    %cst_20 = arith.constant 2.000000e+00 : f32
    %31 = vector.broadcast %cst_20 : f32 to vector<3x128xf32>
    %32 = arith.mulf %31, %22 : vector<3x128xf32>
    %33 = arith.addf %30, %32 : vector<3x128xf32>
    %cst_21 = arith.constant 1.83787704 : f32
    %34 = vector.broadcast %cst_21 : f32 to vector<3x128xf32>
    %35 = arith.addf %33, %34 : vector<3x128xf32>
    %cst_22 = arith.constant -5.000000e-01 : f32
    %36 = vector.broadcast %cst_22 : f32 to vector<3x128xf32>
    %37 = arith.mulf %36, %35 : vector<3x128xf32>
    %cst_23 = arith.constant dense<0xFF800000> : vector<128xf32>
    %38 = vector.multi_reduction <maximumf>, %23, %cst_23 [0] : vector<3x128xf32> to vector<128xf32>
    %39 = vector.shape_cast %38 : vector<128xf32> to vector<1x128xf32>
    %40 = vector.broadcast %39 : vector<1x128xf32> to vector<3x128xf32>
    %41 = arith.subf %23, %40 : vector<3x128xf32>
    %42 = math.exp %41 : vector<3x128xf32>
    %cst_24 = arith.constant dense<0.000000e+00> : vector<128xf32>
    %43 = vector.multi_reduction <add>, %42, %cst_24 [0] : vector<3x128xf32> to vector<128xf32>
    %44 = vector.shape_cast %43 : vector<128xf32> to vector<1x128xf32>
    %45 = arith.addf %41, %37 : vector<3x128xf32>
    %46 = math.exp %45 : vector<3x128xf32>
    %cst_25 = arith.constant dense<0.000000e+00> : vector<128xf32>
    %47 = vector.multi_reduction <add>, %46, %cst_25 [0] : vector<3x128xf32> to vector<128xf32>
    %48 = vector.shape_cast %47 : vector<128xf32> to vector<1x128xf32>
    %cst_26 = arith.constant 9.99999971E-10 : f32
    %49 = vector.broadcast %cst_26 : f32 to vector<1x128xf32>
    %50 = arith.mulf %49, %44 : vector<1x128xf32>
    %51 = arith.addf %48, %50 : vector<1x128xf32>
    %52 = math.log %51 : vector<1x128xf32>
    %53 = math.log %44 : vector<1x128xf32>
    %54 = arith.subf %52, %53 : vector<1x128xf32>
    %c0_27 = arith.constant 0 : index
    %c0_28 = arith.constant 0 : index
    %55 = vector.load %arg9[%c0_27, %c0_28] : memref<1x128xf32, #tpu.memory_space<vmem>>, vector<1x128xf32>
    tpu.vector_store %arg9[%c0_27, %c0_28], %54 {strides = array<i32>} : memref<1x128xf32, #tpu.memory_space<vmem>>, vector<1x128xf32>,
    return
  }
  func.func @transform_0(%arg0: i32) -> (i32, i32) {
    %c0_i32 = arith.constant 0 : i32
    %c0_i32_0 = arith.constant 0 : i32
    return %c0_i32, %arg0 : i32, i32
  }
  func.func @transform_1(%arg0: i32) -> (i32, i32) {
    %c0_i32 = arith.constant 0 : i32
    %c0_i32_0 = arith.constant 0 : i32
    return %c0_i32, %arg0 : i32, i32
  }
  func.func @transform_2(%arg0: i32) -> (i32, i32) {
    %c0_i32 = arith.constant 0 : i32
    %c0_i32_0 = arith.constant 0 : i32
    %c0_i32_1 = arith.constant 0 : i32
    return %c0_i32, %c0_i32_0 : i32, i32
  }
  func.func @transform_3(%arg0: i32) -> (i32, i32) {
    %c0_i32 = arith.constant 0 : i32
    %c0_i32_0 = arith.constant 0 : i32
    %c0_i32_1 = arith.constant 0 : i32
    return %c0_i32, %c0_i32_0 : i32, i32
  }
  func.func @transform_4(%arg0: i32) -> (i32, i32) {
    %c0_i32 = arith.constant 0 : i32
    %c0_i32_0 = arith.constant 0 : i32
    %c0_i32_1 = arith.constant 0 : i32
    return %c0_i32, %c0_i32_0 : i32, i32
  }
  func.func @transform_5(%arg0: i32) -> (i32, i32) {
    %c0_i32 = arith.constant 0 : i32
    %c0_i32_0 = arith.constant 0 : i32
    %c0_i32_1 = arith.constant 0 : i32
    return %c0_i32, %c0_i32_0 : i32, i32
  }
  func.func @transform_6(%arg0: i32) -> (i32, i32) {
    %c0_i32 = arith.constant 0 : i32
    %c0_i32_0 = arith.constant 0 : i32
    %c0_i32_1 = arith.constant 0 : i32
    return %c0_i32, %c0_i32_0 : i32, i32
  }
  func.func @transform_7(%arg0: i32) -> (i32, i32) {
    %c0_i32 = arith.constant 0 : i32
    %c0_i32_0 = arith.constant 0 : i32
    %c0_i32_1 = arith.constant 0 : i32
    return %c0_i32, %c0_i32_0 : i32, i32
  }
  func.func @transform_8(%arg0: i32) -> (i32, i32) {
    %c0_i32 = arith.constant 0 : i32
    %c0_i32_0 = arith.constant 0 : i32
    return %c0_i32, %arg0 : i32, i32
  }
}

</mosaic_0001>

<llo_original>
// kernel: tpu_custom_call.1
$region0: #{tpu_custom_call.1}
  #allocation0 [shape = 'u32[]', space=smem, size = 0x4, offset = 0x4, fixed_abs, tag = 'smem constant byte address 0x4 - core index']
  #allocation1 [shape = 'u32[72,128]{1,0:T(1,128)}', space=vmem, size = 0x9000, scoped, tag = 'internal scratch']
  %s0 = inlined_call_operand.vmem [shape: f32[16,128], index: 0, kind: input, shape index: {}]
  %s1 = inlined_call_operand.vmem [shape: f32[1,128], index: 1, kind: input, shape index: {}]
  %s2 = inlined_call_operand.vmem [shape: f32[64,16], index: 2, kind: input, shape index: {}]
  %s3 = inlined_call_operand.vmem [shape: f32[64,1], index: 3, kind: input, shape index: {}]
  %s4 = inlined_call_operand.vmem [shape: f32[32,64], index: 4, kind: input, shape index: {}]
  %s5 = inlined_call_operand.vmem [shape: f32[32,1], index: 5, kind: input, shape index: {}]
  %s6 = inlined_call_operand.vmem [shape: f32[24,32], index: 6, kind: input, shape index: {}]
  %s7 = inlined_call_operand.vmem [shape: f32[24,1], index: 7, kind: input, shape index: {}]
  %s8 = inlined_call_operand.hbm [shape: f32[1,128], index: 8, kind: output, shape index: {}]
  %s9 = sld [smem:[#allocation0]]
  $region42: #{tpu_custom_call.1} parent=0
    _
  %s11 = ssub.s32 1, %s9
  %s12 = scalar_select 0, %s11, %s9
  $region1: #{tpu_custom_call.1} parent=0
    #allocation2 [shape = 'u8[512]{0}', space=vmem, size = 0x400, scoped, tag = 'output window, operand 0, single buffered']
    #allocation3 [shape = 's32[1]{0}', space=sflag, size = 0x4, scoped, tag = 'scoped memory for tpu_custom_call.1']
    %13 = vsyncpa [#allocation3], 0
    // Predicated region
    $region2: #{tpu_custom_call.1} parent=1 // pred_check
      _
    $region3: #{tpu_custom_call.1} parent=1 // pred_check_branch
      %15 = sbr.rel (0) target = $region5
    $region4: #{tpu_custom_call.1} parent=1 // pred_region
      _
    $region5: #{tpu_custom_call.1} parent=1 // pred_fallthru
      _
    // Predicated region
    $region6: #{tpu_custom_call.1} parent=1 // pred_check
      _
    $region7: #{tpu_custom_call.1} parent=1 // pred_check_branch
      %17 = sbr.rel (0) target = $region9
    $region8: #{tpu_custom_call.1} parent=1 // pred_region
      _
    $region9: #{tpu_custom_call.1} parent=1 // pred_fallthru
      _
    // Predicated region
    $region10: #{tpu_custom_call.1} parent=1 // pred_check
      _
    $region11: #{tpu_custom_call.1} parent=1 // pred_check_branch
      %19 = sbr.rel (0) target = $region13
    $region12: #{tpu_custom_call.1} parent=1 // pred_region
      _
    $region13: #{tpu_custom_call.1} parent=1 // pred_fallthru
      _
    // Predicated region
    $region14: #{tpu_custom_call.1} parent=1 // pred_check
      _
    $region15: #{tpu_custom_call.1} parent=1 // pred_check_branch
      %21 = sbr.rel (0) target = $region17
    $region16: #{tpu_custom_call.1} parent=1 // pred_region
      _
    $region17: #{tpu_custom_call.1} parent=1 // pred_fallthru
      _
    // Predicated region
    $region18: #{tpu_custom_call.1} parent=1 // pred_check
      _
    $region19: #{tpu_custom_call.1} parent=1 // pred_check_branch
      %23 = sbr.rel (0) target = $region21
    $region20: #{tpu_custom_call.1} parent=1 // pred_region
      _
    $region21: #{tpu_custom_call.1} parent=1 // pred_fallthru
      _
    // Predicated region
    $region22: #{tpu_custom_call.1} parent=1 // pred_check
      _
    $region23: #{tpu_custom_call.1} parent=1 // pred_check_branch
      %25 = sbr.rel (0) target = $region25
    $region24: #{tpu_custom_call.1} parent=1 // pred_region
      _
    $region25: #{tpu_custom_call.1} parent=1 // pred_fallthru
      _
    // Predicated region
    $region26: #{tpu_custom_call.1} parent=1 // pred_check
      _
    $region27: #{tpu_custom_call.1} parent=1 // pred_check_branch
      %27 = sbr.rel (0) target = $region29
    $region28: #{tpu_custom_call.1} parent=1 // pred_region
      _
    $region29: #{tpu_custom_call.1} parent=1 // pred_fallthru
      _
    // Predicated region
    $region30: #{tpu_custom_call.1} parent=1 // pred_check
      _
    $region31: #{tpu_custom_call.1} parent=1 // pred_check_branch
      %29 = sbr.rel (0) target = $region33
    $region32: #{tpu_custom_call.1} parent=1 // pred_region
      _
    $region33: #{tpu_custom_call.1} parent=1 // pred_fallthru
      _
    %v30 = vld [vmem:[%s0] sm:$0xff]
    %v31 = vld [vmem:[%s0 + $0x8] sm:$0xff]
    %v32 = vld [vmem:[%s1] sm:$0x1]
    %v33 = vld [vmem:[%s2] sm:$0xff]
    %v34 = vld [vmem:[%s2 + $0x8] sm:$0xff]
    %v35 = vld [vmem:[%s2 + $0x10] sm:$0xff]
    %v36 = vld [vmem:[%s2 + $0x18] sm:$0xff]
    %v37 = vld [vmem:[%s2 + $0x20] sm:$0xff]
    %v38 = vld [vmem:[%s2 + $0x28] sm:$0xff]
    %v39 = vld [vmem:[%s2 + $0x30] sm:$0xff]
    %v40 = vld [vmem:[%s2 + $0x38] sm:$0xff]
    %v41 = vld [vmem:[%s3] sm:$0xff]
    %v42 = vld [vmem:[%s3 + $0x8] sm:$0xff]
    %v43 = vld [vmem:[%s3 + $0x10] sm:$0xff]
    %v44 = vld [vmem:[%s3 + $0x18] sm:$0xff]
    %v45 = vld [vmem:[%s3 + $0x20] sm:$0xff]
    %v46 = vld [vmem:[%s3 + $0x28] sm:$0xff]
    %v47 = vld [vmem:[%s3 + $0x30] sm:$0xff]
    %v48 = vld [vmem:[%s3 + $0x38] sm:$0xff]
    %50 = vset.pattern.permute.xlu0 0
    %51 = vperm.xlu0 %50, %v41
    %v52 = vpop.permute.xlu0 %51
    %55 = vset.pattern.permute.xlu0 0
    %56 = vperm.xlu0 %55, %v42
    %v57 = vpop.permute.xlu0 %56
    %60 = vset.pattern.permute.xlu0 0
    %61 = vperm.xlu0 %60, %v43
    %v62 = vpop.permute.xlu0 %61
    %65 = vset.pattern.permute.xlu0 0
    %66 = vperm.xlu0 %65, %v44
    %v67 = vpop.permute.xlu0 %66
    %70 = vset.pattern.permute.xlu0 0
    %71 = vperm.xlu0 %70, %v45
    %v72 = vpop.permute.xlu0 %71
    %75 = vset.pattern.permute.xlu0 0
    %76 = vperm.xlu0 %75, %v46
    %v77 = vpop.permute.xlu0 %76
    %80 = vset.pattern.permute.xlu0 0
    %81 = vperm.xlu0 %80, %v47
    %v82 = vpop.permute.xlu0 %81
    %85 = vset.pattern.permute.xlu0 0
    %86 = vperm.xlu0 %85, %v48
    %v87 = vpop.permute.xlu0 %86
    %vm89 = vcmask 130048
    %v91 = vsel %vm89, %v33, 0
    %v94 = vsel %vm89, %v34, 0
    %v97 = vsel %vm89, %v35, 0
    %v100 = vsel %vm89, %v36, 0
    %v103 = vsel %vm89, %v37, 0
    %v106 = vsel %vm89, %v38, 0
    %v109 = vsel %vm89, %v39, 0
    %v112 = vsel %vm89, %v40, 0
    %114 = vmatpush.msra.mxu0 0.0
    %115 = vmatpush.msra.mxu0 0.0
    %116 = vmatpush.msra.mxu0 0.0
    %117 = vmatpush.msra.mxu0 0.0
    %118 = vmatpush.msra.mxu0 0.0
    %119 = vmatpush.msra.mxu0 0.0
    %120 = vmatpush.msra.mxu0 0.0
    %121 = vmatpush.msra.mxu0 0.0
    %122 = vmatpush.msra.mxu0 0.0
    %123 = vmatpush.msra.mxu0 0.0
    %124 = vmatpush.msra.mxu0 0.0
    %125 = vmatpush.msra.mxu0 0.0
    %126 = vmatpush.msra.mxu0 0.0
    %127 = vmatpush.msra.mxu0 0.0
    %128 = vmatpush.msra.mxu0 %v31
    %129 = vmatpush.msra.mxu0 %v30
    %130 = vmatmul.f32.gmra.mxu0 %v91
    %v131 = vpop.f32.mrf.mxu0
    %v132 = vadd.f32 %v52, %v131
    %133 = vmatmul.f32.gmra.mxu0 %v94
    %v134 = vpop.f32.mrf.mxu0
    %v135 = vadd.f32 %v57, %v134
    %136 = vmatmul.f32.gmra.mxu0 %v97
    %v137 = vpop.f32.mrf.mxu0
    %v138 = vadd.f32 %v62, %v137
    %139 = vmatmul.f32.gmra.mxu0 %v100
    %v140 = vpop.f32.mrf.mxu0
    %v141 = vadd.f32 %v67, %v140
    %142 = vmatmul.f32.gmra.mxu0 %v103
    %v143 = vpop.f32.mrf.mxu0
    %v144 = vadd.f32 %v72, %v143
    %145 = vmatmul.f32.gmra.mxu0 %v106
    %v146 = vpop.f32.mrf.mxu0
    %v147 = vadd.f32 %v77, %v146
    %148 = vmatmul.f32.gmra.mxu0 %v109
    %v149 = vpop.f32.mrf.mxu0
    %v150 = vadd.f32 %v82, %v149
    %151 = vmatmul.f32.gmra.mxu0 %v112
    %v152 = vpop.f32.mrf.mxu0
    %v153 = vadd.f32 %v87, %v152
    %154 = vdwg.mxu0
    %v155 = vmax.f32 %v132, 0.0
    %v156 = vmax.f32 %v135, 0.0
    %v157 = vmax.f32 %v138, 0.0
    %v158 = vmax.f32 %v141, 0.0
    %v159 = vmax.f32 %v144, 0.0
    %v160 = vmax.f32 %v147, 0.0
    %v161 = vmax.f32 %v150, 0.0
    %v162 = vmax.f32 %v153, 0.0
    %v163 = vld [vmem:[%s4] sm:$0xff]
    %v164 = vld [vmem:[%s4 + $0x8] sm:$0xff]
    %v165 = vld [vmem:[%s4 + $0x10] sm:$0xff]
    %v166 = vld [vmem:[%s4 + $0x18] sm:$0xff]
    %v167 = vld [vmem:[%s5] sm:$0xff]
    %v168 = vld [vmem:[%s5 + $0x8] sm:$0xff]
    %v169 = vld [vmem:[%s5 + $0x10] sm:$0xff]
    %v170 = vld [vmem:[%s5 + $0x18] sm:$0xff]
    %172 = vset.pattern.permute.xlu0 0
    %173 = vperm.xlu0 %172, %v167
    %v174 = vpop.permute.xlu0 %173
    %177 = vset.pattern.permute.xlu0 0
    %178 = vperm.xlu0 %177, %v168
    %v179 = vpop.permute.xlu0 %178
    %182 = vset.pattern.permute.xlu0 0
    %183 = vperm.xlu0 %182, %v169
    %v184 = vpop.permute.xlu0 %183
    %187 = vset.pattern.permute.xlu0 0
    %188 = vperm.xlu0 %187, %v170
    %v189 = vpop.permute.xlu0 %188
    %vm191 = vcmask 523264
    %v193 = vsel %vm191, %v163, 0
    %v196 = vsel %vm191, %v164, 0
    %v199 = vsel %vm191, %v165, 0
    %v202 = vsel %vm191, %v166, 0
    %204 = vmatpush.msra.mxu0 0.0
    %205 = vmatpush.msra.mxu0 0.0
    %206 = vmatpush.msra.mxu0 0.0
    %207 = vmatpush.msra.mxu0 0.0
    %208 = vmatpush.msra.mxu0 0.0
    %209 = vmatpush.msra.mxu0 0.0
    %210 = vmatpush.msra.mxu0 0.0
    %211 = vmatpush.msra.mxu0 0.0
    %212 = vmatpush.msra.mxu0 %v162
    %213 = vmatpush.msra.mxu0 %v161
    %214 = vmatpush.msra.mxu0 %v160
    %215 = vmatpush.msra.mxu0 %v159
    %216 = vmatpush.msra.mxu0 %v158
    %217 = vmatpush.msra.mxu0 %v157
    %218 = vmatpush.msra.mxu0 %v156
    %219 = vmatpush.msra.mxu0 %v155
    %220 = vmatmul.f32.gmra.mxu0 %v193
    %v221 = vpop.f32.mrf.mxu0
    %v222 = vadd.f32 %v174, %v221
    %223 = vmatmul.f32.gmra.mxu0 %v196
    %v224 = vpop.f32.mrf.mxu0
    %v225 = vadd.f32 %v179, %v224
    %226 = vmatmul.f32.gmra.mxu0 %v199
    %v227 = vpop.f32.mrf.mxu0
    %v228 = vadd.f32 %v184, %v227
    %229 = vmatmul.f32.gmra.mxu0 %v202
    %v230 = vpop.f32.mrf.mxu0
    %v231 = vadd.f32 %v189, %v230
    %232 = vdwg.mxu0
    %v233 = vmax.f32 %v222, 0.0
    %v234 = vmax.f32 %v225, 0.0
    %v235 = vmax.f32 %v228, 0.0
    %v236 = vmax.f32 %v231, 0.0
    %v237 = vld [vmem:[%s6] sm:$0xff]
    %v238 = vld [vmem:[%s6 + $0x8] sm:$0xff]
    %v239 = vld [vmem:[%s6 + $0x10] sm:$0xff]
    %v240 = vld [vmem:[%s7] sm:$0xff]
    %v241 = vld [vmem:[%s7 + $0x8] sm:$0xff]
    %v242 = vld [vmem:[%s7 + $0x10] sm:$0xff]
    %244 = vset.pattern.permute.xlu0 0
    %245 = vperm.xlu0 %244, %v240
    %v246 = vpop.permute.xlu0 %245
    %249 = vset.pattern.permute.xlu0 0
    %250 = vperm.xlu0 %249, %v241
    %v251 = vpop.permute.xlu0 %250
    %254 = vset.pattern.permute.xlu0 0
    %255 = vperm.xlu0 %254, %v242
    %v256 = vpop.permute.xlu0 %255
    %vm258 = vcmask 261120
    %v260 = vsel %vm258, %v237, 0
    %v263 = vsel %vm258, %v238, 0
    %v266 = vsel %vm258, %v239, 0
    %268 = vmatpush.msra.mxu0 0.0
    %269 = vmatpush.msra.mxu0 0.0
    %270 = vmatpush.msra.mxu0 0.0
    %271 = vmatpush.msra.mxu0 0.0
    %272 = vmatpush.msra.mxu0 0.0
    %273 = vmatpush.msra.mxu0 0.0
    %274 = vmatpush.msra.mxu0 0.0
    %275 = vmatpush.msra.mxu0 0.0
    %276 = vmatpush.msra.mxu0 0.0
    %277 = vmatpush.msra.mxu0 0.0
    %278 = vmatpush.msra.mxu0 0.0
    %279 = vmatpush.msra.mxu0 0.0
    %280 = vmatpush.msra.mxu0 %v236
    %281 = vmatpush.msra.mxu0 %v235
    %282 = vmatpush.msra.mxu0 %v234
    %283 = vmatpush.msra.mxu0 %v233
    %284 = vmatmul.f32.gmra.mxu0 %v260
    %v285 = vpop.f32.mrf.mxu0
    %v286 = vadd.f32 %v246, %v285
    %287 = vmatmul.f32.gmra.mxu0 %v263
    %v288 = vpop.f32.mrf.mxu0
    %v289 = vadd.f32 %v251, %v288
    %290 = vmatmul.f32.gmra.mxu0 %v266
    %v291 = vpop.f32.mrf.mxu0
    %v292 = vadd.f32 %v256, %v291
    %293 = vdwg.mxu0
    %v294 = vsub.f32 0.0, %v289
    %v295 = vmul.f32 %v294, 1.442695
    %v296 = vpow.pop %v295
    %v298 = vperm.slane %v32, 0
    %v300 = vsub.f32 %v298, %v286
    %v301 = vmul.f32 %v300, %v296
    %v302 = vmul.f32 %v301, %v301
    %v303 = vmul.f32 %v289, 2.0
    %v304 = vadd.f32 %v302, %v303
    %v305 = vadd.f32 %v304, 1.837877
    %v306 = vmul.f32 %v305, -0.5
    %vm307 = vcmask 1042432
    %v308 = vsel %vm307, %v292, -inf
    %v309 = vrot.slane %v308, 4
    %v310 = vmax.f32 %v308, %v309
    %v311 = vrot.slane %v310, 2
    %v312 = vmax.f32 %v310, %v311
    %v313 = vrot.slane %v312, 1
    %v314 = vmax.f32 %v312, %v313
    %v315 = vsub.f32 %v292, %v314
    %v316 = vmul.f32 %v315, 1.442695
    %v317 = vpow.pop %v316
    %v318 = vsel %vm307, %v317, 0.0
    %v319 = vrot.slane %v318, 4
    %v320 = vadd.f32 %v318, %v319
    %v321 = vrot.slane %v320, 2
    %v322 = vadd.f32 %v320, %v321
    %v323 = vrot.slane %v322, 1
    %v324 = vadd.f32 %v322, %v323
    %v325 = vadd.f32 %v315, %v306
    %v326 = vmul.f32 %v325, 1.442695
    %v327 = vpow.pop %v326
    %v328 = vsel %vm307, %v327, 0.0
    %v329 = vrot.slane %v328, 4
    %v330 = vadd.f32 %v328, %v329
    %v331 = vrot.slane %v330, 2
    %v332 = vadd.f32 %v330, %v331
    %v333 = vrot.slane %v332, 1
    %v334 = vadd.f32 %v332, %v333
    %v335 = vmul.f32 %v324, 1e-09
    %v336 = vadd.f32 %v334, %v335
    %v337 = vlog2.pop %v336
    %v338 = vmul.f32 %v337, 0.6931472
    %v339 = vlog2.pop %v324
    %v340 = vmul.f32 %v339, 0.6931472
    %v341 = vsub.f32 %v338, %v340
    %342 = vst [vmem:[#allocation2] sm:$0x1] %v341
    // Predicated region
    $region34: #{tpu_custom_call.1} parent=1 // pred_check
      _
    $region35: #{tpu_custom_call.1} parent=1 // pred_check_branch
      %344 = sbr.rel (0) target = $region37
    $region36: #{tpu_custom_call.1} parent=1 // pred_region
      %346 = vsyncadd [#allocation3], 0
      %s348 = sshll.u32 [#allocation2], 4
      %s349 = int_to_ptr.vmem [resolvable:$true] %s348
      %s350 = sshll.u32 %s8, 4
      %s351 = int_to_ptr.hbm [resolvable:$true] %s350
      %353 = dma.vmem_to_hbm [thread:$0]  %s349, 16, %s351, [#allocation3]
    $region37: #{tpu_custom_call.1} parent=1 // pred_fallthru
      _
    // Predicated region
    $region38: #{tpu_custom_call.1} parent=1 // pred_check
      _
    $region39: #{tpu_custom_call.1} parent=1 // pred_check_branch
      %355 = sbr.rel (0) target = $region41
    $region40: #{tpu_custom_call.1} parent=1 // pred_region
      %357 = dma.done [#allocation3], 16
    $region41: #{tpu_custom_call.1} parent=1 // pred_fallthru
      _
    %358 = vsyncpa [#allocation3], 1

</llo_original>
